<compile_context>
chip_gen: v7x
topology: tpu7x:2x2x1
jax: 0.10.0
libtpu: 0.0.40
codegen_flags: <defaults>
</compile_context>

<pallas_src>
import numpy as np
import jax
import jax.numpy as jnp
from jax.experimental import pallas as pl
from jax.experimental.pallas import tpu as pltpu


def _make_subsample_kernel(stride: int, res_out: int):
    def kernel(x_ref, o_ref):
        # x_ref: (res, res, C)  -- one full input image (batch dim squeezed)
        # o_ref: (res_out, res_out, C)
        rows = []
        for r in range(res_out):
            src = x_ref[r * stride]                        # (res, C); skipped rows never loaded
            cols = [src[c * stride:c * stride + 1, :]      # static (1, C) slices
                    for c in range(res_out)]
            rows.append(jnp.concatenate(cols, axis=0)[None])   # (1, res_out, C)
        o_ref[...] = jnp.concatenate(rows, axis=0)         # single lane-dense store
    return kernel


def levit_subsample(hidden_state, stride: int, resolution: int):
    """hidden_state: (B, resolution*resolution, C) -> (B, res_out*res_out, C)."""
    B, S, C = hidden_state.shape
    assert S == resolution * resolution, (S, resolution)
    res_out = (resolution - 1) // stride + 1               # matches [::stride] length

    x4 = hidden_state.reshape(B, resolution, resolution, C)
    kernel = _make_subsample_kernel(stride, res_out)

    out4 = pl.pallas_call(
        kernel,
        out_shape=jax.ShapeDtypeStruct((B, res_out, res_out, C), hidden_state.dtype),
        grid=(B,),
        in_specs=[pl.BlockSpec((None, resolution, resolution, C),
                               lambda b: (b, 0, 0, 0))],
        out_specs=pl.BlockSpec((None, res_out, res_out, C),
                               lambda b: (b, 0, 0, 0)),
        compiler_params=pltpu.CompilerParams(
            dimension_semantics=("parallel",)),
    )(x4)
    return out4.reshape(B, res_out * res_out, C)


class LevitSubsample:
    """Mirror of the PyTorch module: LevitSubsample(stride, resolution)(hidden_state)."""

    def __init__(self, stride, resolution):
        self.stride = stride
        self.resolution = resolution

    def __call__(self, hidden_state):
        return levit_subsample(hidden_state, self.stride, self.resolution)


def _ref_subsample(hidden_state, stride, resolution):
    B, _, C = hidden_state.shape
    return (hidden_state.reshape(B, resolution, resolution, C)
            [:, ::stride, ::stride].reshape(B, -1, C))


if __name__ == "__main__":
    key = jax.random.PRNGKey(0)
    configs = [
        # (batch, resolution, stride, channels)
        (2, 8, 2, 128),   # even resolution, lane-dense channels
        (2, 7, 2, 64),    # odd resolution -> ceil(res/stride) output side (LeViT 7 -> 4)
    ]
    for (B, res, stride, C) in configs:
        key, sub = jax.random.split(key)
        x = jax.random.normal(sub, (B, res * res, C), jnp.float32)
        module = LevitSubsample(stride, res)
        out = jax.block_until_ready(module(x))
        ref = _ref_subsample(x, stride, res)
        np.testing.assert_array_equal(np.asarray(out), np.asarray(ref))
        res_out = (res - 1) // stride + 1
        assert out.shape == (B, res_out * res_out, C), out.shape
    print("KERNEL_OK")
</pallas_src>

<mosaic_0001>
module attributes {stable_mosaic.version = 11 : i64} {
  func.func @kernel(%arg0: i32, %arg1: memref<1x8x8x128xf32, #tpu.memory_space<vmem>>, %arg2: memref<1x4x4x128xf32, #tpu.memory_space<vmem>>) attributes {dimension_semantics = [#tpu.dimension_semantics<parallel>], iteration_bounds = array<i64: 2>, scalar_prefetch = 0 : i64, scratch_operands = 0 : i64, tpu.core_type = #tpu.core_type<tc>, window_params = [{transform_indices = @transform_0, window_bounds = array<i64: 1, 8, 8, 128>}, {transform_indices = @transform_1, window_bounds = array<i64: 1, 4, 4, 128>}]} {
    %c0 = arith.constant 0 : index
    %c0_0 = arith.constant 0 : index
    %c0_1 = arith.constant 0 : index
    %c0_2 = arith.constant 0 : index
    %0 = vector.load %arg1[%c0, %c0_0, %c0_1, %c0_2] : memref<1x8x8x128xf32, #tpu.memory_space<vmem>>, vector<1x1x8x128xf32>
    %1 = vector.shape_cast %0 : vector<1x1x8x128xf32> to vector<8x128xf32>
    %2 = vector.extract_strided_slice %1 {offsets = [0, 0], sizes = [1, 128], strides = [1, 1]} : vector<8x128xf32> to vector<1x128xf32>
    %3 = vector.extract_strided_slice %1 {offsets = [2, 0], sizes = [1, 128], strides = [1, 1]} : vector<8x128xf32> to vector<1x128xf32>
    %4 = vector.extract_strided_slice %1 {offsets = [4, 0], sizes = [1, 128], strides = [1, 1]} : vector<8x128xf32> to vector<1x128xf32>
    %5 = vector.extract_strided_slice %1 {offsets = [6, 0], sizes = [1, 128], strides = [1, 1]} : vector<8x128xf32> to vector<1x128xf32>
    %6 = tpu.concatenate %2, %3, %4, %5 in 0 : vector<1x128xf32>, vector<1x128xf32>, vector<1x128xf32>, vector<1x128xf32> -> vector<4x128xf32>
    %7 = vector.shape_cast %6 : vector<4x128xf32> to vector<1x4x128xf32>
    %c0_3 = arith.constant 0 : index
    %c2 = arith.constant 2 : index
    %c0_4 = arith.constant 0 : index
    %c0_5 = arith.constant 0 : index
    %8 = vector.load %arg1[%c0_3, %c2, %c0_4, %c0_5] : memref<1x8x8x128xf32, #tpu.memory_space<vmem>>, vector<1x1x8x128xf32>
    %9 = vector.shape_cast %8 : vector<1x1x8x128xf32> to vector<8x128xf32>
    %10 = vector.extract_strided_slice %9 {offsets = [0, 0], sizes = [1, 128], strides = [1, 1]} : vector<8x128xf32> to vector<1x128xf32>
    %11 = vector.extract_strided_slice %9 {offsets = [2, 0], sizes = [1, 128], strides = [1, 1]} : vector<8x128xf32> to vector<1x128xf32>
    %12 = vector.extract_strided_slice %9 {offsets = [4, 0], sizes = [1, 128], strides = [1, 1]} : vector<8x128xf32> to vector<1x128xf32>
    %13 = vector.extract_strided_slice %9 {offsets = [6, 0], sizes = [1, 128], strides = [1, 1]} : vector<8x128xf32> to vector<1x128xf32>
    %14 = tpu.concatenate %10, %11, %12, %13 in 0 : vector<1x128xf32>, vector<1x128xf32>, vector<1x128xf32>, vector<1x128xf32> -> vector<4x128xf32>
    %15 = vector.shape_cast %14 : vector<4x128xf32> to vector<1x4x128xf32>
    %c0_6 = arith.constant 0 : index
    %c4 = arith.constant 4 : index
    %c0_7 = arith.constant 0 : index
    %c0_8 = arith.constant 0 : index
    %16 = vector.load %arg1[%c0_6, %c4, %c0_7, %c0_8] : memref<1x8x8x128xf32, #tpu.memory_space<vmem>>, vector<1x1x8x128xf32>
    %17 = vector.shape_cast %16 : vector<1x1x8x128xf32> to vector<8x128xf32>
    %18 = vector.extract_strided_slice %17 {offsets = [0, 0], sizes = [1, 128], strides = [1, 1]} : vector<8x128xf32> to vector<1x128xf32>
    %19 = vector.extract_strided_slice %17 {offsets = [2, 0], sizes = [1, 128], strides = [1, 1]} : vector<8x128xf32> to vector<1x128xf32>
    %20 = vector.extract_strided_slice %17 {offsets = [4, 0], sizes = [1, 128], strides = [1, 1]} : vector<8x128xf32> to vector<1x128xf32>
    %21 = vector.extract_strided_slice %17 {offsets = [6, 0], sizes = [1, 128], strides = [1, 1]} : vector<8x128xf32> to vector<1x128xf32>
    %22 = tpu.concatenate %18, %19, %20, %21 in 0 : vector<1x128xf32>, vector<1x128xf32>, vector<1x128xf32>, vector<1x128xf32> -> vector<4x128xf32>
    %23 = vector.shape_cast %22 : vector<4x128xf32> to vector<1x4x128xf32>
    %c0_9 = arith.constant 0 : index
    %c6 = arith.constant 6 : index
    %c0_10 = arith.constant 0 : index
    %c0_11 = arith.constant 0 : index
    %24 = vector.load %arg1[%c0_9, %c6, %c0_10, %c0_11] : memref<1x8x8x128xf32, #tpu.memory_space<vmem>>, vector<1x1x8x128xf32>
    %25 = vector.shape_cast %24 : vector<1x1x8x128xf32> to vector<8x128xf32>
    %26 = vector.extract_strided_slice %25 {offsets = [0, 0], sizes = [1, 128], strides = [1, 1]} : vector<8x128xf32> to vector<1x128xf32>
    %27 = vector.extract_strided_slice %25 {offsets = [2, 0], sizes = [1, 128], strides = [1, 1]} : vector<8x128xf32> to vector<1x128xf32>
    %28 = vector.extract_strided_slice %25 {offsets = [4, 0], sizes = [1, 128], strides = [1, 1]} : vector<8x128xf32> to vector<1x128xf32>
    %29 = vector.extract_strided_slice %25 {offsets = [6, 0], sizes = [1, 128], strides = [1, 1]} : vector<8x128xf32> to vector<1x128xf32>
    %30 = tpu.concatenate %26, %27, %28, %29 in 0 : vector<1x128xf32>, vector<1x128xf32>, vector<1x128xf32>, vector<1x128xf32> -> vector<4x128xf32>
    %31 = vector.shape_cast %30 : vector<4x128xf32> to vector<1x4x128xf32>
    %32 = tpu.concatenate %7, %15, %23, %31 in 0 : vector<1x4x128xf32>, vector<1x4x128xf32>, vector<1x4x128xf32>, vector<1x4x128xf32> -> vector<4x4x128xf32>
    %c0_12 = arith.constant 0 : index
    %c0_13 = arith.constant 0 : index
    %c0_14 = arith.constant 0 : index
    %c0_15 = arith.constant 0 : index
    %33 = vector.load %arg2[%c0_12, %c0_13, %c0_14, %c0_15] : memref<1x4x4x128xf32, #tpu.memory_space<vmem>>, vector<1x4x4x128xf32>
    %34 = vector.shape_cast %33 : vector<1x4x4x128xf32> to vector<4x4x128xf32>
    %35 = vector.shape_cast %32 : vector<4x4x128xf32> to vector<1x4x4x128xf32>
    tpu.vector_store %arg2[%c0_12, %c0_13, %c0_14, %c0_15], %35 {strides = array<i32>} : memref<1x4x4x128xf32, #tpu.memory_space<vmem>>, vector<1x4x4x128xf32>,
    return
  }
  func.func @transform_0(%arg0: i32) -> (i32, i32, i32, i32) {
    %c0_i32 = arith.constant 0 : i32
    %c0_i32_0 = arith.constant 0 : i32
    %c0_i32_1 = arith.constant 0 : i32
    %c0_i32_2 = arith.constant 0 : i32
    return %arg0, %c0_i32, %c0_i32_0, %c0_i32_1 : i32, i32, i32, i32
  }
  func.func @transform_1(%arg0: i32) -> (i32, i32, i32, i32) {
    %c0_i32 = arith.constant 0 : i32
    %c0_i32_0 = arith.constant 0 : i32
    %c0_i32_1 = arith.constant 0 : i32
    %c0_i32_2 = arith.constant 0 : i32
    return %arg0, %c0_i32, %c0_i32_0, %c0_i32_1 : i32, i32, i32, i32
  }
}

</mosaic_0001>

<llo_original>
// kernel: tpu_custom_call.1
$region0: #{tpu_custom_call.1}
  #allocation0 [shape = 'u32[]', space=smem, size = 0x4, offset = 0x4, fixed_abs, tag = 'smem constant byte address 0x4 - core index']
  #allocation1 [shape = 'u32[144,128]{1,0:T(1,128)}', space=vmem, size = 0x12000, scoped, tag = 'internal scratch']
  %s0 = inlined_call_operand.hbm [shape: f32[2,8,8,128], index: 0, kind: input, shape index: {}]
  %s1 = inlined_call_operand.hbm [shape: f32[2,4,4,128], index: 1, kind: output, shape index: {}]
  %s2 = sld [smem:[#allocation0]]
  $region41: #{tpu_custom_call.1} parent=0
    _
  %s4 = ssub.s32 1, %s2
  %s5 = scalar_select 0, %s4, %s2
  $region1: #{tpu_custom_call.1} parent=0
    #allocation2 [shape = 'u8[65536]{0}', space=vmem, size = 0x10000, scoped, tag = 'input window, operand 0']
    #allocation3 [shape = 's32[2]{0}', space=sflag, size = 0x8, scoped, tag = 'scoped memory for tpu_custom_call.1']
    #allocation4 [shape = 's32[2]{0}', space=sflag, size = 0x8, scoped, tag = 'scoped memory for tpu_custom_call.1']
    #allocation5 [shape = 'u8[16384]{0}', space=vmem, size = 0x4000, scoped, tag = 'output window, operand 0']
    %6 = vsyncpa [#allocation3], 0
    %s7 = scalar_lea.sflag [#allocation3], 1
    %8 = vsyncpa %s7, 0
    %9 = vsyncpa [#allocation4], 0
    %s10 = scalar_lea.sflag [#allocation4], 1
    %11 = vsyncpa %s10, 0
    loop: start=0, step=1, limit=4
    $region2: #{tpu_custom_call.1} parent=1 // loop_pre_header
      _
    $region3: #{tpu_custom_call.1} parent=1 // loop_header
      %s13 = sphi 0, %s17
      %p14 = scmp.ge.s32.totalorder %s13, 4
      %s23 = sphi 0, %s25
      %s26 = sphi 0, %s23
      %s27 = sphi 0, %s26
      %s43 = sphi 0, %s27
      %s49 = sphi 0, %s51
      %s52 = sphi 0, %s49
      %s53 = sphi 0, %s52
      %s69 = sphi 0, %s53
    $region4: #{tpu_custom_call.1} parent=1 // loop_header_branch
      %16 = sbr.rel (%p14) target = $region8
    $region5: #{tpu_custom_call.1} parent=1 // loop_body
      %s18 = ssub.s32 %s13, 1
      %s19 = ssub.s32 %s13, 2
      %s20 = sadd.s32 %s13, 1
      %s21 = ssub.s32 %s13, %s20
      %p22 = scmp.eq.s32.totalorder %s21, 0
      %s24 = sadd.s32 %s23, 1
      %s25 = scalar_select %p22, %s23, %s24
      %p28 = pneg %p22
      %p29 = scmp.eq.s32.totalorder %s13, 1
      %p30 = por %p28, %p29
      %p31 = scmp.ne.s32.totalorder %s23, %s26
      %p32 = scmp.eq.s32.totalorder %s13, 0
      %p33 = por %p31, %p32
      %p34 = scmp.ne.s32.totalorder %s23, %s26
      %p35 = scmp.eq.s32.totalorder %s18, 1
      %p36 = por %p34, %p35
      %p37 = scmp.ne.s32.totalorder %s26, %s27
      %p38 = scmp.eq.s32.totalorder %s18, 0
      %p39 = por %p37, %p38
      %p40 = scmp.ne.s32.totalorder %s26, %s27
      %p41 = scmp.eq.s32.totalorder %s19, 1
      %p42 = por %p40, %p41
      %p44 = scmp.ne.s32.totalorder %s27, %s43
      %p45 = scmp.eq.s32.totalorder %s19, 0
      %p46 = por %p44, %p45
      %s47 = ssub.s32 %s13, %s20
      %p48 = scmp.eq.s32.totalorder %s47, 0
      %s50 = sadd.s32 %s49, 1
      %s51 = scalar_select %p48, %s49, %s50
      %p54 = pneg %p48
      %p55 = scmp.eq.s32.totalorder %s13, 1
      %p56 = por %p54, %p55
      %p57 = scmp.ne.s32.totalorder %s49, %s52
      %p58 = scmp.eq.s32.totalorder %s13, 0
      %p59 = por %p57, %p58
      %p60 = scmp.ne.s32.totalorder %s49, %s52
      %p61 = scmp.eq.s32.totalorder %s18, 1
      %p62 = por %p60, %p61
      %p63 = scmp.ne.s32.totalorder %s52, %s53
      %p64 = scmp.eq.s32.totalorder %s18, 0
      %p65 = por %p63, %p64
      %p66 = scmp.ne.s32.totalorder %s52, %s53
      %p67 = scmp.eq.s32.totalorder %s19, 1
      %p68 = por %p66, %p67
      %p70 = scmp.ne.s32.totalorder %s53, %s69
      %p71 = scmp.eq.s32.totalorder %s19, 0
      %p72 = por %p70, %p71
      %p73 = scmp.le.s32.totalorder 1, %s13
      %p74 = scmp.lt.s32.totalorder %s13, 3
      %p75 = pnand %p73, %p74
      %p76 = pneg %p75
      // Predicated region
      $region9: #{tpu_custom_call.1} parent=5 // pred_check
        _
      $region10: #{tpu_custom_call.1} parent=5 // pred_check_branch
        %78 = sbr.rel (%p75) target = $region12
      $region11: #{tpu_custom_call.1} parent=5 // pred_region
        %s79 = ssub.s32 %s13, 1
      $region12: #{tpu_custom_call.1} parent=5 // pred_fallthru
        _
      %p80 = scmp.lt.s32.totalorder %s13, 2
      // Predicated region
      $region13: #{tpu_custom_call.1} parent=5 // pred_check
        %p81 = pneg %p80
      $region14: #{tpu_custom_call.1} parent=5 // pred_check_branch
        %83 = sbr.rel (%p81) target = $region16
      $region15: #{tpu_custom_call.1} parent=5 // pred_region
        // Predicated region
        $region17: #{tpu_custom_call.1} parent=15 // pred_check
          %p84 = pneg %p33
        $region18: #{tpu_custom_call.1} parent=15 // pred_check_branch
          %86 = sbr.rel (%p84) target = $region20
        $region19: #{tpu_custom_call.1} parent=15 // pred_region
          %s87 = sand.u32 %s23, 1
          %s88 = scalar_lea.sflag [#allocation3], %s87
          %s89 = sand.u32 %s23, 1
          %s90 = smul.addr %s89, 64
          %s91 = scalar_lea.vmem [#allocation2], %s90
          %s93 = ssub.s32 1024, 1024
          %94 = vsyncadd %s88, %s93
          %s95 = smul.addr %s13, 8
          %s96 = smul.addr %s95, 128
          %s97 = scalar_lea.hbm %s0, %s96
          %s98 = sshll.u32 %s91, 4
          %s99 = int_to_ptr.vmem [resolvable:$true] %s98
          %104 = dma.hbm_to_vmem [thread:$0]  %s97, 1024, %s99, %s88, 128, 128, 8
        $region20: #{tpu_custom_call.1} parent=15 // pred_fallthru
          _
      $region16: #{tpu_custom_call.1} parent=5 // pred_fallthru
        _
      %p105 = scmp.le.s32.totalorder 1, %s13
      %p106 = scmp.lt.s32.totalorder %s13, 3
      %p107 = pnand %p105, %p106
      %p108 = pneg %p107
      // Predicated region
      $region21: #{tpu_custom_call.1} parent=5 // pred_check
        _
      $region22: #{tpu_custom_call.1} parent=5 // pred_check_branch
        %110 = sbr.rel (%p107) target = $region24
      $region23: #{tpu_custom_call.1} parent=5 // pred_region
        %s111 = ssub.s32 %s13, 1
        %s112 = sand.u32 %s26, 1
        %s113 = scalar_lea.sflag [#allocation3], %s112
        %s114 = sand.u32 %s26, 1
        %s115 = smul.addr %s114, 64
        %s116 = scalar_lea.vmem [#allocation2], %s115
        // Predicated region
        $region25: #{tpu_custom_call.1} parent=23 // pred_check
          %p117 = pneg %p39
        $region26: #{tpu_custom_call.1} parent=23 // pred_check_branch
          %119 = sbr.rel (%p117) target = $region28
        $region27: #{tpu_custom_call.1} parent=23 // pred_region
          %120 = dma.done %s113, 1024
        $region28: #{tpu_custom_call.1} parent=23 // pred_fallthru
          _
        %s121 = sand.u32 %s26, 1
        %s122 = scalar_lea.sflag [#allocation3], %s121
        %s123 = sand.u32 %s26, 1
        %s124 = smul.addr %s123, 64
        %s125 = scalar_lea.vmem [#allocation2], %s124
        %p126 = pneg %p39
        %p127 = pneg %p36
        %p128 = pneg %p65
        %p129 = pneg %p62
        %s130 = sand.u32 %s52, 1
        %s131 = scalar_lea.sflag [#allocation4], %s130
        %s132 = sand.u32 %s52, 1
        %s133 = smul.addr %s132, 16
        %s134 = scalar_lea.vmem [#allocation5], %s133
        %v135 = vld [vmem:[%s116] sm:$0xff]
        %v137 = vrot.slane %v135, 1
        %v139 = vrot.slane %v135, 2
        %v141 = vrot.slane %v135, 3
        %vm143 = vcmask 1040384
        %v144 = vsel %vm143, %v135, %v137
        %vm145 = vcmask 1041408
        %v146 = vsel %vm145, %v144, %v139
        %vm147 = vcmask 1042432
        %v148 = vsel %vm147, %v146, %v141
        %s149 = scalar_lea.vmem %s116, 16 [#allocation2]
        %v150 = vld [vmem:[%s149] sm:$0xff]
        %v152 = vrot.slane %v150, 1
        %v154 = vrot.slane %v150, 2
        %v156 = vrot.slane %v150, 3
        %v158 = vsel %vm143, %v150, %v152
        %v159 = vsel %vm145, %v158, %v154
        %v160 = vsel %vm147, %v159, %v156
        %s161 = scalar_lea.vmem %s116, 32 [#allocation2]
        %v162 = vld [vmem:[%s161] sm:$0xff]
        %v164 = vrot.slane %v162, 1
        %v166 = vrot.slane %v162, 2
        %v168 = vrot.slane %v162, 3
        %v170 = vsel %vm143, %v162, %v164
        %v171 = vsel %vm145, %v170, %v166
        %v172 = vsel %vm147, %v171, %v168
        %s173 = scalar_lea.vmem %s116, 48 [#allocation2]
        %v174 = vld [vmem:[%s173] sm:$0xff]
        %v176 = vrot.slane %v174, 1
        %v178 = vrot.slane %v174, 2
        %v180 = vrot.slane %v174, 3
        %v182 = vsel %vm143, %v174, %v176
        %v183 = vsel %vm145, %v182, %v178
        %v184 = vsel %vm147, %v183, %v180
        %185 = vst [vmem:[%s134] sm:$0xf] %v148
        %186 = vst [vmem:[%s134 + $0x4] sm:$0xf] %v160
        %187 = vst [vmem:[%s134 + $0x8] sm:$0xf] %v172
        %188 = vst [vmem:[%s134 + $0xc] sm:$0xf] %v184
        %s189 = sand.u32 %s52, 1
        %s190 = scalar_lea.sflag [#allocation4], %s189
        %s191 = sand.u32 %s52, 1
        %s192 = smul.addr %s191, 16
        %s193 = scalar_lea.vmem [#allocation5], %s192
        // Predicated region
        $region29: #{tpu_custom_call.1} parent=23 // pred_check
          %p194 = pneg %p62
        $region30: #{tpu_custom_call.1} parent=23 // pred_check_branch
          %196 = sbr.rel (%p194) target = $region32
        $region31: #{tpu_custom_call.1} parent=23 // pred_region
          %s198 = ssub.s32 256, 256
          %199 = vsyncadd %s190, %s198
          %s200 = smul.addr %s18, 4
          %s201 = smul.addr %s200, 64
          %s202 = scalar_lea.hbm %s1, %s201
          %s203 = sshll.u32 %s193, 4
          %s204 = int_to_ptr.vmem [resolvable:$true] %s203
          %209 = dma.vmem_to_hbm [thread:$0]  %s204, 256, %s202, %s190, 64, 64, 4
        $region32: #{tpu_custom_call.1} parent=23 // pred_fallthru
          _
      $region24: #{tpu_custom_call.1} parent=5 // pred_fallthru
        _
      %p210 = scmp.le.s32.totalorder 2, %s13
      // Predicated region
      $region33: #{tpu_custom_call.1} parent=5 // pred_check
        %p211 = pneg %p210
      $region34: #{tpu_custom_call.1} parent=5 // pred_check_branch
        %213 = sbr.rel (%p211) target = $region36
      $region35: #{tpu_custom_call.1} parent=5 // pred_region
        %s214 = ssub.s32 %s13, 2
        // Predicated region
        $region37: #{tpu_custom_call.1} parent=35 // pred_check
          %p215 = pneg %p68
        $region38: #{tpu_custom_call.1} parent=35 // pred_check_branch
          %217 = sbr.rel (%p215) target = $region40
        $region39: #{tpu_custom_call.1} parent=35 // pred_region
          %s218 = sand.u32 %s53, 1
          %s219 = scalar_lea.sflag [#allocation4], %s218
          %s220 = sand.u32 %s53, 1
          %s221 = smul.addr %s220, 16
          %s222 = scalar_lea.vmem [#allocation5], %s221
          %223 = dma.done %s219, 256
        $region40: #{tpu_custom_call.1} parent=35 // pred_fallthru
          _
      $region36: #{tpu_custom_call.1} parent=5 // pred_fallthru
        _
    $region6: #{tpu_custom_call.1} parent=1 // loop_footer
      %s17 = sadd.s32 1, %s13
    $region7: #{tpu_custom_call.1} parent=1 // loop_footer_branch
      %12 = sbr.rel target = $region3
    $region8: #{tpu_custom_call.1} parent=1 // loop_exit
      _
    %224 = vsyncpa [#allocation3], 1
    %s225 = scalar_lea.sflag [#allocation3], 1
    %226 = vsyncpa %s225, 1
    %227 = vsyncpa [#allocation4], 1
    %s228 = scalar_lea.sflag [#allocation4], 1
    %229 = vsyncpa %s228, 1

</llo_original>
